<compile_context>
chip_gen: v6e
topology: v6e:2x2x1
jax: 0.10.0
libtpu: 0.0.40
codegen_flags: <defaults>
</compile_context>

<pallas_src>
import jax
import jax.numpy as jnp
from jax.experimental import pallas as pl
from jax.experimental.pallas import tpu as pltpu

LANE = 128      # vreg lane width
SUBLANE = 8     # f32 sublane count


def _round_up(n, m):
    return ((n + m - 1) // m) * m


def logreg_kernel(w2_ref, b2_ref, x_ref, o_ref):
    # w2_ref / b2_ref are (1, 1) SMEM scalars holding w/2 and b/2.
    # x_ref / o_ref are (tr, 128) VMEM tiles.
    w2 = w2_ref[0, 0]
    b2 = b2_ref[0, 0]
    # sigmoid(x*w + b) == 0.5 * tanh((x*w + b)/2) + 0.5, with the /2 folded
    # into the scalars: single EUP tanh + 3 VALU ops per vreg.
    o_ref[...] = jnp.tanh(x_ref[...] * w2 + b2) * 0.5 + 0.5


def logistic_regression_forward(x, weight, bias, *, tile_rows=4096,
                                min_pallas_elems=65536):
    """sigmoid(x @ W.T + b) for a 1x1 Linear; output shape == x.shape, f32."""
    orig_shape = x.shape
    xf = x.reshape(-1).astype(jnp.float32)
    total = xf.size

    w = weight.reshape(()).astype(jnp.float32)
    b = bias.reshape(()).astype(jnp.float32)

    # Small-input (or empty) fast path: XLA fuses this into one pass; the
    # pallas_call launch plus repack overhead would dominate at this size.
    if total == 0 or total < min_pallas_elems:
        return jax.nn.sigmoid(xf * w + b).reshape(orig_shape)

    # ---- Lane-dense tiling ----------------------------------------------
    lane_rows = pl.cdiv(total, LANE)                       # rows of 128 lanes
    tr = min(tile_rows, _round_up(lane_rows, SUBLANE))     # tile rows (mult of 8)
    if lane_rows >= 2 * SUBLANE:
        # Enough data for >= 2 tiles: guarantee >= 2 grid steps so both v7x
        # TensorCores get work under dimension_semantics=("parallel",).
        tr = min(tr, _round_up((lane_rows + 1) // 2, SUBLANE))
    rows = pl.cdiv(lane_rows, tr) * tr
    padded = rows * LANE

    if padded == total:
        # Aligned case: pure reshape view, no extra HBM pass.
        xp = xf.reshape(rows, LANE)
    else:
        # Ragged case: pad the tail up to a whole number of tiles.
        xp = jnp.pad(xf, (0, padded - total)).reshape(rows, LANE)

    # Fold the sigmoid 1/2 factor into the SMEM scalars.
    w2 = (0.5 * w).reshape(1, 1)
    b2 = (0.5 * b).reshape(1, 1)

    out = pl.pallas_call(
        logreg_kernel,
        out_shape=jax.ShapeDtypeStruct((rows, LANE), jnp.float32),
        grid=(rows // tr,),
        in_specs=[
            pl.BlockSpec(memory_space=pltpu.MemorySpace.SMEM),   # w/2 scalar
            pl.BlockSpec(memory_space=pltpu.MemorySpace.SMEM),   # b/2 scalar
            pl.BlockSpec((tr, LANE), lambda i: (i, 0)),          # x row-tile
        ],
        out_specs=pl.BlockSpec((tr, LANE), lambda i: (i, 0)),
        compiler_params=pltpu.CompilerParams(
            dimension_semantics=("parallel",),   # shard row tiles across TCs
        ),
    )(w2, b2, xp)

    if padded == total:
        return out.reshape(orig_shape)           # no slice needed
    # Drop alignment padding (padded rows hold sigmoid(b)), restore shape.
    return out.reshape(-1)[:total].reshape(orig_shape)


if __name__ == "__main__":
    key = jax.random.PRNGKey(0)
    kx, kw, kb, kx2 = jax.random.split(key, 4)

    # Deterministic parameters (PyTorch Linear(1,1) default: uniform(-1, 1)).
    weight = jax.random.uniform(kw, (1, 1), minval=-1.0, maxval=1.0,
                                dtype=jnp.float32)
    bias = jax.random.uniform(kb, (1,), minval=-1.0, maxval=1.0,
                              dtype=jnp.float32)

    def ref(x):
        return jax.nn.sigmoid(x @ weight.T + bias)

    # 1) Small example consistent with Linear(1,1): batch of 8 scalar features.
    #    Force the Pallas path (ragged/padded single-tile case).
    x = jax.random.normal(kx, (8, 1), dtype=jnp.float32)
    y = logistic_regression_forward(x, weight, bias, min_pallas_elems=0)
    y = jax.block_until_ready(y)
    assert y.shape == ref(x).shape, "shape mismatch vs reference (small)"
    assert jnp.allclose(y, ref(x), atol=1e-5), "mismatch vs reference (small)"

    # 2) Slightly larger batch: exercises the aligned (no pad / no slice) path
    #    and a multi-step parallel grid.
    x2 = jax.random.normal(kx2, (2048, 1), dtype=jnp.float32)
    y2 = logistic_regression_forward(x2, weight, bias, min_pallas_elems=0)
    y2 = jax.block_until_ready(y2)
    assert jnp.allclose(y2, ref(x2), atol=1e-5), "mismatch vs reference (multi-tile)"

    # 3) Default small-N fast path (bypasses Pallas) stays correct.
    y3 = jax.block_until_ready(logistic_regression_forward(x, weight, bias))
    assert jnp.allclose(y3, ref(x), atol=1e-5), "mismatch vs reference (fast path)"

    print("KERNEL_OK")
</pallas_src>

<mosaic_0001>
module attributes {stable_mosaic.version = 11 : i64} {
  func.func @logreg_kernel(%arg0: i32, %arg1: memref<1x1xf32, #tpu.memory_space<smem>>, %arg2: memref<1x1xf32, #tpu.memory_space<smem>>, %arg3: memref<8x128xf32, #tpu.memory_space<vmem>>, %arg4: memref<8x128xf32, #tpu.memory_space<vmem>>) attributes {dimension_semantics = [#tpu.dimension_semantics<parallel>], iteration_bounds = array<i64: 1>, scalar_prefetch = 0 : i64, scratch_operands = 0 : i64, tpu.core_type = #tpu.core_type<tc>, window_params = [{transform_indices = @transform_0, window_bounds = array<i64: 1, 1>}, {transform_indices = @transform_1, window_bounds = array<i64: 1, 1>}, {transform_indices = @transform_2, window_bounds = array<i64: 8, 128>}, {transform_indices = @transform_3, window_bounds = array<i64: 8, 128>}]} {
    %c0 = arith.constant 0 : index
    %c0_0 = arith.constant 0 : index
    %0 = memref.load %arg1[%c0, %c0_0] : memref<1x1xf32, #tpu.memory_space<smem>>
    %c0_1 = arith.constant 0 : index
    %c0_2 = arith.constant 0 : index
    %1 = memref.load %arg2[%c0_1, %c0_2] : memref<1x1xf32, #tpu.memory_space<smem>>
    %c0_3 = arith.constant 0 : index
    %c0_4 = arith.constant 0 : index
    %2 = vector.load %arg3[%c0_3, %c0_4] : memref<8x128xf32, #tpu.memory_space<vmem>>, vector<8x128xf32>
    %3 = vector.broadcast %0 : f32 to vector<8x128xf32>
    %4 = arith.mulf %2, %3 : vector<8x128xf32>
    %5 = vector.broadcast %1 : f32 to vector<8x128xf32>
    %6 = arith.addf %4, %5 : vector<8x128xf32>
    %7 = math.tanh %6 : vector<8x128xf32>
    %cst = arith.constant 5.000000e-01 : f32
    %8 = vector.broadcast %cst : f32 to vector<8x128xf32>
    %9 = arith.mulf %7, %8 : vector<8x128xf32>
    %cst_5 = arith.constant 5.000000e-01 : f32
    %10 = vector.broadcast %cst_5 : f32 to vector<8x128xf32>
    %11 = arith.addf %9, %10 : vector<8x128xf32>
    %c0_6 = arith.constant 0 : index
    %c0_7 = arith.constant 0 : index
    %12 = vector.load %arg4[%c0_6, %c0_7] : memref<8x128xf32, #tpu.memory_space<vmem>>, vector<8x128xf32>
    tpu.vector_store %arg4[%c0_6, %c0_7], %11 {strides = array<i32>} : memref<8x128xf32, #tpu.memory_space<vmem>>, vector<8x128xf32>,
    return
  }
  func.func @transform_0(%arg0: i32) -> (i32, i32) {
    %c0_i32 = arith.constant 0 : i32
    %c0_i32_0 = arith.constant 0 : i32
    %c0_i32_1 = arith.constant 0 : i32
    return %c0_i32, %c0_i32_0 : i32, i32
  }
  func.func @transform_1(%arg0: i32) -> (i32, i32) {
    %c0_i32 = arith.constant 0 : i32
    %c0_i32_0 = arith.constant 0 : i32
    %c0_i32_1 = arith.constant 0 : i32
    return %c0_i32, %c0_i32_0 : i32, i32
  }
  func.func @transform_2(%arg0: i32) -> (i32, i32) {
    %c0_i32 = arith.constant 0 : i32
    %c0_i32_0 = arith.constant 0 : i32
    return %arg0, %c0_i32 : i32, i32
  }
  func.func @transform_3(%arg0: i32) -> (i32, i32) {
    %c0_i32 = arith.constant 0 : i32
    %c0_i32_0 = arith.constant 0 : i32
    return %arg0, %c0_i32 : i32, i32
  }
}

</mosaic_0001>

<llo_original>
// kernel: tpu_custom_call.1
$region0: #{tpu_custom_call.1}
  #allocation0 [shape = 'u32[]', space=smem, size = 0x4, offset = 0x4, fixed_abs, tag = 'smem constant byte address 0x4 - core index']
  #allocation1 [shape = 'u32[144,128]{1,0:T(1,128)}', space=vmem, size = 0x12000, scoped, tag = 'internal scratch']
  #allocation2 [shape = 'f32[1,1]{1,0:T(1,128)S(6)}', space=smem, size = 0x200, scoped, tag = 'scoped memory for tpu_custom_call.1']
  #allocation3 [shape = 'f32[1,1]{1,0:T(1,128)S(6)}', space=smem, size = 0x200, scoped, tag = 'scoped memory for tpu_custom_call.1']
  %s0 = inlined_call_operand.<no memory space> [shape: f32[1,1], index: 0, kind: input, shape index: {}]
  %s1 = inlined_call_operand.<no memory space> [shape: f32[1,1], index: 1, kind: input, shape index: {}]
  %s2 = inlined_call_operand.hbm [shape: f32[8,128], index: 2, kind: input, shape index: {}]
  %s3 = inlined_call_operand.hbm [shape: f32[8,128], index: 3, kind: output, shape index: {}]
  %s4 = sld [smem:[#allocation0]]
  $region26: #{tpu_custom_call.1} parent=0
    _
  %s6 = ssub.s32 1, %s4
  %s7 = scalar_select 0, %s6, %s4
  %8 = sst [smem:[#allocation2]] %s0
  %9 = sst [smem:[#allocation3]] %s1
  $region1: #{tpu_custom_call.1} parent=0
    #allocation4 [shape = 'u8[4096]{0}', space=vmem, size = 0x1000, scoped, tag = 'input window, operand 2, single buffered']
    #allocation5 [shape = 's32[1]{0}', space=sflag, size = 0x4, scoped, tag = 'scoped memory for tpu_custom_call.1']
    #allocation6 [shape = 's32[1]{0}', space=sflag, size = 0x4, scoped, tag = 'scoped memory for tpu_custom_call.1']
    #allocation7 [shape = 'u8[4096]{0}', space=vmem, size = 0x1000, scoped, tag = 'output window, operand 0, single buffered']
    %10 = vsyncpa [#allocation5], 0
    %11 = vsyncpa [#allocation6], 0
    // Predicated region
    $region2: #{tpu_custom_call.1} parent=1 // pred_check
      _
    $region3: #{tpu_custom_call.1} parent=1 // pred_check_branch
      %13 = sbr.rel (0) target = $region5
    $region4: #{tpu_custom_call.1} parent=1 // pred_region
      _
    $region5: #{tpu_custom_call.1} parent=1 // pred_fallthru
      _
    // Predicated region
    $region6: #{tpu_custom_call.1} parent=1 // pred_check
      _
    $region7: #{tpu_custom_call.1} parent=1 // pred_check_branch
      %15 = sbr.rel (0) target = $region9
    $region8: #{tpu_custom_call.1} parent=1 // pred_region
      _
    $region9: #{tpu_custom_call.1} parent=1 // pred_fallthru
      _
    // Predicated region
    $region10: #{tpu_custom_call.1} parent=1 // pred_check
      _
    $region11: #{tpu_custom_call.1} parent=1 // pred_check_branch
      %17 = sbr.rel (0) target = $region13
    $region12: #{tpu_custom_call.1} parent=1 // pred_region
      %s19 = ssub.s32 128, 128
      %20 = vsyncadd [#allocation5], %s19
      %s22 = sshll.u32 [#allocation4], 4
      %s23 = int_to_ptr.vmem [resolvable:$true] %s22
      %25 = dma.hbm_to_vmem [thread:$0]  %s2, 128, %s23, [#allocation5]
    $region13: #{tpu_custom_call.1} parent=1 // pred_fallthru
      _
    // Predicated region
    $region14: #{tpu_custom_call.1} parent=1 // pred_check
      _
    $region15: #{tpu_custom_call.1} parent=1 // pred_check_branch
      %27 = sbr.rel (0) target = $region17
    $region16: #{tpu_custom_call.1} parent=1 // pred_region
      %28 = dma.done [#allocation5], 128
    $region17: #{tpu_custom_call.1} parent=1 // pred_fallthru
      _
    %s29 = sld [smem:[#allocation2]]
    %s30 = sld [smem:[#allocation3]]
    %v31 = vld [vmem:[#allocation4] sm:$0xff]
    %v32 = vstv %s29
    %v33 = vmul.f32 %v31, %v32
    %v34 = vstv %s30
    %v35 = vadd.f32 %v33, %v34
    %v36 = vtanh.pop %v35
    %v37 = vmul.f32 %v36, 0.5
    %v38 = vadd.f32 %v37, 0.5
    %39 = vst [vmem:[#allocation7] sm:$0xff] %v38
    // Predicated region
    $region18: #{tpu_custom_call.1} parent=1 // pred_check
      _
    $region19: #{tpu_custom_call.1} parent=1 // pred_check_branch
      %41 = sbr.rel (0) target = $region21
    $region20: #{tpu_custom_call.1} parent=1 // pred_region
      %s43 = ssub.s32 128, 128
      %44 = vsyncadd [#allocation6], %s43
      %s46 = sshll.u32 [#allocation7], 4
      %s47 = int_to_ptr.vmem [resolvable:$true] %s46
      %49 = dma.vmem_to_hbm [thread:$0]  %s47, 128, %s3, [#allocation6]
    $region21: #{tpu_custom_call.1} parent=1 // pred_fallthru
      _
    // Predicated region
    $region22: #{tpu_custom_call.1} parent=1 // pred_check
      _
    $region23: #{tpu_custom_call.1} parent=1 // pred_check_branch
      %51 = sbr.rel (0) target = $region25
    $region24: #{tpu_custom_call.1} parent=1 // pred_region
      %52 = dma.done [#allocation6], 128
    $region25: #{tpu_custom_call.1} parent=1 // pred_fallthru
      _
    %53 = vsyncpa [#allocation5], 1
    %54 = vsyncpa [#allocation6], 1

</llo_original>
